<compile_context>
chip_gen: v6e
topology: v6e:2x2x1
jax: 0.10.0
libtpu: 0.0.40
codegen_flags: <defaults>
</compile_context>

<pallas_src>
import jax
import jax.numpy as jnp
from jax.experimental import pallas as pl
from jax.experimental.pallas import tpu as pltpu


def _round_up(a, b):
    return (a + b - 1) // b * b


def _cdiv(a, b):
    return -(-a // b)


def _vmem_capacity_bytes():
    """Physical VMEM of the local chip; conservative 64 MiB fallback (v7x)."""
    try:
        return int(pltpu.get_tpu_info().vmem_capacity_bytes)
    except Exception:
        return 64 * 1024 * 1024


def _tile_vmem_bytes(tm, tn, k, cbytes, obytes):
    """Per-step VMEM footprint: double-buffered DMA slabs + f32 acc temp."""
    x_buf = 2 * tm * k * cbytes          # activation rows (double-buffered)
    w_buf = 2 * k * tn * cbytes          # weight slab (conservatively x2)
    o_buf = 2 * tm * tn * obytes         # output tile (double-buffered)
    b_buf = 2 * tn * 4                   # bias
    acc = tm * tn * 4                    # f32 matmul-result temporary
    return x_buf + w_buf + o_buf + b_buf + acc


def _choose_tiling(m, k, e, cbytes, obytes, tm_target, budget):
    """Pick (tm, tn, E_pad).  Prefer a single resident weight slab (tn=E_pad);
    shrink tm first, tile E only as a last resort (rounding E_pad up to tn)."""
    sub = 16  # row alignment safe for both f32 (>=8) and bf16 sublane packing
    tm0 = max(sub, min(_round_up(tm_target, sub), _round_up(m, sub)))

    def shrink_tm(tm, tn):
        while tm > 2 * sub and _tile_vmem_bytes(tm, tn, k, cbytes, obytes) > budget:
            tm = max(sub, _round_up(tm // 2, sub))
        return tm

    # Preferred: weight fully resident -> DMA'd once, never re-streamed.
    e_pad = _round_up(e, 128)
    tm = shrink_tm(tm0, e_pad)
    if _tile_vmem_bytes(tm, e_pad, k, cbytes, obytes) <= budget:
        return tm, e_pad, e_pad

    # Fallback: tile the embedding dim; round E up to the tile so the MXU N
    # dimension stays full and the weight re-fetch count stays low.
    for tn in (1024, 512, 256, 128):
        e_pad = _round_up(e, tn)
        tm = shrink_tm(tm0, tn)
        if _tile_vmem_bytes(tm, tn, k, cbytes, obytes) <= budget:
            return tm, tn, e_pad

    return 2 * sub, 128, _round_up(e, 128)


def patch_embed_kernel(x_ref, w_ref, b_ref, o_ref):
    # x_ref: (tm, K_pad) compute dtype; w_ref: (K_pad, tn) compute dtype;
    # b_ref: (1, tn) f32; o_ref: (tm, tn) output dtype.
    acc = jnp.dot(x_ref[...], w_ref[...], preferred_element_type=jnp.float32)
    o_ref[...] = (acc + b_ref[...]).astype(o_ref.dtype)


def patch_embed_pallas(x, weight, bias, patch_size, *,
                       compute_dtype=jnp.bfloat16,
                       out_dtype=None,
                       tm_target=None):
    """x: (B, C, H, W); weight: (E, C, p, p); bias: (E,)  ->  (B, N, E)."""
    B, C, H, W = x.shape
    E = weight.shape[0]
    p = patch_size
    nh, nw = H // p, W // p
    num_patches = nh * nw
    if out_dtype is None:
        out_dtype = x.dtype

    # ---- patch extraction glue (pixel order (c, kh, kw) matches Conv2d) ----
    xp = x.reshape(B, C, nh, p, nw, p)
    xp = jnp.transpose(xp, (0, 2, 4, 1, 3, 5))
    xp = xp.reshape(B * num_patches, C * p * p)
    wt = weight.reshape(E, C * p * p).T          # (K, E)
    M, K = xp.shape

    cbytes = jnp.dtype(compute_dtype).itemsize
    obytes = jnp.dtype(out_dtype).itemsize

    # ---- K alignment: pad to 32 (128 when the waste is <= 12.5%) ----
    k32 = _round_up(K, 32)
    k128 = _round_up(K, 128)
    K_pad = k128 if (k128 - K) * 8 <= K else k32
    if K_pad != K:
        xp = jnp.pad(xp, ((0, 0), (0, K_pad - K)))
        wt = jnp.pad(wt, ((0, K_pad - K), (0, 0)))

    # ---- VMEM budget + tiling ----
    cap = _vmem_capacity_bytes()
    budget = min(cap * 3 // 4, cap - (16 << 20))   # 48 MB on v7x, 96 MB on v6e/v5e
    budget = max(budget, 24 << 20)
    if tm_target is None:
        tm_target = 1024 if cap >= (100 << 20) else 512

    tm, tn, E_pad = _choose_tiling(M, K_pad, E, cbytes, obytes, tm_target, budget)

    # Enough tiles for v7x's 2 TensorCores (both grid axes are "parallel").
    num_i, num_j = _cdiv(M, tm), E_pad // tn
    while num_i * num_j < 4 and tm > 256:
        tm = max(256, _round_up(tm // 2, 16))
        num_i = _cdiv(M, tm)
    grid = (num_i, num_j)

    # ---- E padding (zero columns; sliced off after the call) ----
    if E_pad != E:
        wt = jnp.pad(wt, ((0, 0), (0, E_pad - E)))
        bias = jnp.pad(bias, (0, E_pad - E))

    xp = xp.astype(compute_dtype)
    wt = wt.astype(compute_dtype)
    b2 = bias.astype(jnp.float32).reshape(1, E_pad)

    cost = pl.CostEstimate(
        flops=2 * M * K * E,
        transcendentals=0,
        bytes_accessed=int(M * K_pad * cbytes + K_pad * E_pad * cbytes
                           + E_pad * 4 + M * E_pad * obytes))

    out = pl.pallas_call(
        patch_embed_kernel,
        out_shape=jax.ShapeDtypeStruct((M, E_pad), out_dtype),
        grid_spec=pltpu.PrefetchScalarGridSpec(
            num_scalar_prefetch=0,
            grid=grid,
            in_specs=[
                pl.BlockSpec((tm, K_pad), lambda i, j: (i, 0)),   # activation rows
                pl.BlockSpec((K_pad, tn), lambda i, j: (0, j)),   # weight columns
                pl.BlockSpec((1, tn), lambda i, j: (0, j)),       # bias
            ],
            out_specs=pl.BlockSpec((tm, tn), lambda i, j: (i, j)),
        ),
        compiler_params=pltpu.CompilerParams(
            # Both axes independent -> megacore / 2-TC sharding on v7x.
            dimension_semantics=("parallel", "parallel"),
            # Let XLA fuse the patch transpose/reshape/cast producer into the
            # activation input DMA instead of an extra HBM round trip.
            allow_input_fusion=[True, False, False],
            vmem_limit_bytes=int(budget),
        ),
        cost_estimate=cost,
    )(xp, wt, b2)

    out = out.reshape(B, num_patches, E_pad)
    if E_pad != E:
        out = out[:, :, :E]
    return out


if __name__ == "__main__":
    # Small shapes consistent with the module: img_size=16, patch_size=4,
    # in_chans=4, embed_dim=32  ->  num_patches = 16, output (2, 16, 32).
    B, C, H, W = 2, 4, 16, 16
    patch_size = 4
    embed_dim = 32

    key = jax.random.PRNGKey(0)
    kx, kw, kb = jax.random.split(key, 3)
    x = jax.random.normal(kx, (B, C, H, W), dtype=jnp.float32)
    weight = jax.random.normal(kw, (embed_dim, C, patch_size, patch_size),
                               dtype=jnp.float32) * 0.02
    bias = jax.random.normal(kb, (embed_dim,), dtype=jnp.float32) * 0.02

    # Pure-JAX reference with exact Conv2d(stride=kernel) semantics.
    ref = jax.lax.conv_general_dilated(
        x, weight, window_strides=(patch_size, patch_size), padding="VALID",
        dimension_numbers=("NCHW", "OIHW", "NCHW"))
    ref = ref + bias[None, :, None, None]
    ref = ref.reshape(B, embed_dim, -1).transpose(0, 2, 1)

    # 1) f32 compute + f32 output: exact-parity check vs the Conv2d reference.
    y32 = patch_embed_pallas(x, weight, bias, patch_size,
                             compute_dtype=jnp.float32)
    y32 = jax.block_until_ready(y32)
    assert y32.shape == (B, (H // patch_size) * (W // patch_size), embed_dim)
    assert y32.dtype == x.dtype
    assert jnp.allclose(y32, ref, atol=1e-4, rtol=1e-4)

    # 2) Perf path: bf16 compute (f32 accumulation) + bf16 output, which halves
    #    the dominant output HBM traffic on this memory-bound kernel.
    ybf = patch_embed_pallas(x, weight, bias, patch_size,
                             compute_dtype=jnp.bfloat16,
                             out_dtype=jnp.bfloat16)
    ybf = jax.block_until_ready(ybf)
    assert ybf.shape == ref.shape
    assert ybf.dtype == jnp.bfloat16
    assert jnp.allclose(ybf.astype(jnp.float32), ref, atol=2e-2, rtol=2e-2)

    print("KERNEL_OK")
</pallas_src>

<mosaic_0001>
module attributes {stable_mosaic.version = 11 : i64} {
  func.func @patch_embed_kernel(%arg0: i32, %arg1: i32, %arg2: memref<32x64xf32, #tpu.memory_space<vmem>>, %arg3: memref<64x128xf32, #tpu.memory_space<vmem>>, %arg4: memref<1x128xf32, #tpu.memory_space<vmem>>, %arg5: memref<32x128xf32, #tpu.memory_space<vmem>>) attributes {dimension_semantics = [#tpu.dimension_semantics<parallel>, #tpu.dimension_semantics<parallel>], iteration_bounds = array<i64: 1, 1>, scalar_prefetch = 0 : i64, scratch_operands = 0 : i64, tpu.core_type = #tpu.core_type<tc>, window_params = [{transform_indices = @transform_0, window_bounds = array<i64: 32, 64>}, {transform_indices = @transform_1, window_bounds = array<i64: 64, 128>}, {transform_indices = @transform_2, window_bounds = array<i64: 1, 128>}, {transform_indices = @transform_3, window_bounds = array<i64: 32, 128>}]} {
    %c0 = arith.constant 0 : index
    %c0_0 = arith.constant 0 : index
    %0 = vector.load %arg2[%c0, %c0_0] : memref<32x64xf32, #tpu.memory_space<vmem>>, vector<32x64xf32>
    %c0_1 = arith.constant 0 : index
    %c0_2 = arith.constant 0 : index
    %1 = vector.load %arg3[%c0_1, %c0_2] : memref<64x128xf32, #tpu.memory_space<vmem>>, vector<64x128xf32>
    %cst = arith.constant dense<0.000000e+00> : vector<32x128xf32>
    %2 = tpu.matmul %0, %1, %cst {dimension_numbers = #tpu.dot_dimension_numbers<[1], [0], [0], [1], [0, 0, 1, 1], [], []>} : vector<32x64xf32>, vector<64x128xf32>, vector<32x128xf32> -> vector<32x128xf32>
    %c0_3 = arith.constant 0 : index
    %c0_4 = arith.constant 0 : index
    %3 = vector.load %arg4[%c0_3, %c0_4] : memref<1x128xf32, #tpu.memory_space<vmem>>, vector<1x128xf32>
    %4 = vector.broadcast %3 : vector<1x128xf32> to vector<32x128xf32>
    %5 = arith.addf %2, %4 : vector<32x128xf32>
    %c0_5 = arith.constant 0 : index
    %c0_6 = arith.constant 0 : index
    %6 = vector.load %arg5[%c0_5, %c0_6] : memref<32x128xf32, #tpu.memory_space<vmem>>, vector<32x128xf32>
    tpu.vector_store %arg5[%c0_5, %c0_6], %5 {strides = array<i32>} : memref<32x128xf32, #tpu.memory_space<vmem>>, vector<32x128xf32>,
    return
  }
  func.func @transform_0(%arg0: i32, %arg1: i32) -> (i32, i32) {
    %c0_i32 = arith.constant 0 : i32
    %c0_i32_0 = arith.constant 0 : i32
    return %arg0, %c0_i32 : i32, i32
  }
  func.func @transform_1(%arg0: i32, %arg1: i32) -> (i32, i32) {
    %c0_i32 = arith.constant 0 : i32
    %c0_i32_0 = arith.constant 0 : i32
    return %c0_i32, %arg1 : i32, i32
  }
  func.func @transform_2(%arg0: i32, %arg1: i32) -> (i32, i32) {
    %c0_i32 = arith.constant 0 : i32
    %c0_i32_0 = arith.constant 0 : i32
    return %c0_i32, %arg1 : i32, i32
  }
  func.func @transform_3(%arg0: i32, %arg1: i32) -> (i32, i32) {
    %c0_i32 = arith.constant 0 : i32
    return %arg0, %arg1 : i32, i32
  }
}

</mosaic_0001>

<llo_original>
// kernel: tpu_custom_call.1
$region0: #{tpu_custom_call.1}
  #allocation0 [shape = 'u32[]', space=smem, size = 0x4, offset = 0x4, fixed_abs, tag = 'smem constant byte address 0x4 - core index']
  #allocation1 [shape = 'u32[144,128]{1,0:T(1,128)}', space=vmem, size = 0x12000, scoped, tag = 'internal scratch']
  %s0 = inlined_call_operand.hbm [shape: f32[32,64], index: 0, kind: input, shape index: {}]
  %s1 = inlined_call_operand.hbm [shape: f32[64,128], index: 1, kind: input, shape index: {}]
  %s2 = inlined_call_operand.vmem [shape: f32[1,128], index: 2, kind: input, shape index: {}]
  %s3 = inlined_call_operand.hbm [shape: f32[32,128], index: 3, kind: output, shape index: {}]
  %s4 = sld [smem:[#allocation0]]
  $region30: #{tpu_custom_call.1} parent=0
    _
  %s6 = ssub.s32 1, %s4
  %s7 = scalar_select 0, %s6, %s4
  $region1: #{tpu_custom_call.1} parent=0
    #allocation2 [shape = 'u8[16384]{0}', space=vmem, size = 0x4000, scoped, tag = 'input window, operand 0, single buffered']
    #allocation3 [shape = 's32[1]{0}', space=sflag, size = 0x4, scoped, tag = 'scoped memory for tpu_custom_call.1']
    #allocation4 [shape = 's32[1]{0}', space=sflag, size = 0x4, scoped, tag = 'scoped memory for tpu_custom_call.1']
    #allocation5 [shape = 'u8[32768]{0}', space=vmem, size = 0x8000, scoped, tag = 'input window, operand 1, single buffered']
    #allocation6 [shape = 's32[1]{0}', space=sflag, size = 0x4, scoped, tag = 'scoped memory for tpu_custom_call.1']
    #allocation7 [shape = 'u8[16384]{0}', space=vmem, size = 0x4000, scoped, tag = 'output window, operand 0, single buffered']
    %8 = vsyncpa [#allocation3], 0
    %9 = vsyncpa [#allocation6], 0
    %10 = vsyncpa [#allocation4], 0
    // Predicated region
    $region2: #{tpu_custom_call.1} parent=1 // pred_check
      _
    $region3: #{tpu_custom_call.1} parent=1 // pred_check_branch
      %12 = sbr.rel (0) target = $region5
    $region4: #{tpu_custom_call.1} parent=1 // pred_region
      %s14 = ssub.s32 512, 512
      %15 = vsyncadd [#allocation3], %s14
      %s16 = sshll.u32 [#allocation2], 4
      %s17 = int_to_ptr.vmem [resolvable:$true] %s16
      %22 = dma.hbm_to_vmem [thread:$0]  %s0, 512, %s17, [#allocation3], 128, 128, 8
    $region5: #{tpu_custom_call.1} parent=1 // pred_fallthru
      _
    // Predicated region
    $region6: #{tpu_custom_call.1} parent=1 // pred_check
      _
    $region7: #{tpu_custom_call.1} parent=1 // pred_check_branch
      %24 = sbr.rel (0) target = $region9
    $region8: #{tpu_custom_call.1} parent=1 // pred_region
      %s26 = ssub.s32 1024, 1024
      %27 = vsyncadd [#allocation6], %s26
      %s28 = sshll.u32 [#allocation5], 4
      %s29 = int_to_ptr.vmem [resolvable:$true] %s28
      %34 = dma.hbm_to_vmem [thread:$0]  %s1, 1024, %s29, [#allocation6], 128, 128, 8
    $region9: #{tpu_custom_call.1} parent=1 // pred_fallthru
      _
    // Predicated region
    $region10: #{tpu_custom_call.1} parent=1 // pred_check
      _
    $region11: #{tpu_custom_call.1} parent=1 // pred_check_branch
      %36 = sbr.rel (0) target = $region13
    $region12: #{tpu_custom_call.1} parent=1 // pred_region
      _
    $region13: #{tpu_custom_call.1} parent=1 // pred_fallthru
      _
    // Predicated region
    $region14: #{tpu_custom_call.1} parent=1 // pred_check
      _
    $region15: #{tpu_custom_call.1} parent=1 // pred_check_branch
      %38 = sbr.rel (0) target = $region17
    $region16: #{tpu_custom_call.1} parent=1 // pred_region
      %39 = dma.done [#allocation3], 512
    $region17: #{tpu_custom_call.1} parent=1 // pred_fallthru
      _
    // Predicated region
    $region18: #{tpu_custom_call.1} parent=1 // pred_check
      _
    $region19: #{tpu_custom_call.1} parent=1 // pred_check_branch
      %41 = sbr.rel (0) target = $region21
    $region20: #{tpu_custom_call.1} parent=1 // pred_region
      %42 = dma.done [#allocation6], 1024
    $region21: #{tpu_custom_call.1} parent=1 // pred_fallthru
      _
    %v43 = vld [vmem:[#allocation2] sm:$0xff]
    %v44 = vld [vmem:[#allocation2 + $0x8] sm:$0xff]
    %v45 = vld [vmem:[#allocation2 + $0x10] sm:$0xff]
    %v46 = vld [vmem:[#allocation2 + $0x18] sm:$0xff]
    %v47 = vld [vmem:[#allocation5] sm:$0xff]
    %v48 = vld [vmem:[#allocation5 + $0x8] sm:$0xff]
    %v49 = vld [vmem:[#allocation5 + $0x10] sm:$0xff]
    %v50 = vld [vmem:[#allocation5 + $0x18] sm:$0xff]
    %v51 = vld [vmem:[#allocation5 + $0x20] sm:$0xff]
    %v52 = vld [vmem:[#allocation5 + $0x28] sm:$0xff]
    %v53 = vld [vmem:[#allocation5 + $0x30] sm:$0xff]
    %v54 = vld [vmem:[#allocation5 + $0x38] sm:$0xff]
    %v55 = vld [vmem:[%s2] sm:$0x1]
    %v57 = vlaneseq
    %v58 = vshrl.u32 %v57, 7
    %v59 = vsub.s32 0, %v58
    %v60 = vrot.slane %v55, %v59
    %vm62 = vcmask 523264
    %v64 = vsel %vm62, %v43, 0
    %v67 = vsel %vm62, %v44, 0
    %v70 = vsel %vm62, %v45, 0
    %v73 = vsel %vm62, %v46, 0
    %75 = vmatprep.subr.mxu0 0.0
    %76 = vmatpush1.msra.mxu0 0.0
    %77 = vmatprep.subr.mxu0 0.0
    %78 = vmatpush1.msra.mxu0 0.0
    %79 = vmatprep.subr.mxu0 0.0
    %80 = vmatpush1.msra.mxu0 0.0
    %81 = vmatprep.subr.mxu0 0.0
    %82 = vmatpush1.msra.mxu0 0.0
    %83 = vmatprep.subr.mxu0 0.0
    %84 = vmatpush1.msra.mxu0 0.0
    %85 = vmatprep.subr.mxu0 0.0
    %86 = vmatpush1.msra.mxu0 0.0
    %87 = vmatprep.subr.mxu0 0.0
    %88 = vmatpush1.msra.mxu0 0.0
    %89 = vmatprep.subr.mxu0 0.0
    %90 = vmatpush1.msra.mxu0 0.0
    %91 = vmatprep.subr.mxu0 0.0
    %92 = vmatpush1.msra.mxu0 %v54
    %93 = vmatprep.subr.mxu0 0.0
    %94 = vmatpush1.msra.mxu0 %v53
    %95 = vmatprep.subr.mxu0 0.0
    %96 = vmatpush1.msra.mxu0 %v52
    %97 = vmatprep.subr.mxu0 0.0
    %98 = vmatpush1.msra.mxu0 %v51
    %99 = vmatprep.subr.mxu0 0.0
    %100 = vmatpush1.msra.mxu0 %v50
    %101 = vmatprep.subr.mxu0 0.0
    %102 = vmatpush1.msra.mxu0 %v49
    %103 = vmatprep.subr.mxu0 0.0
    %104 = vmatpush1.msra.mxu0 %v48
    %105 = vmatprep.subr.mxu0 0.0
    %106 = vmatpush1.msra.mxu0 %v47
    %107 = vmatprep.subr.mxu0 0.0
    %108 = vmatpush2.msra.mxu0 0.0
    %109 = vmatprep.subr.mxu0 0.0
    %110 = vmatpush2.msra.mxu0 0.0
    %111 = vmatprep.subr.mxu0 0.0
    %112 = vmatpush2.msra.mxu0 0.0
    %113 = vmatprep.subr.mxu0 0.0
    %114 = vmatpush2.msra.mxu0 0.0
    %115 = vmatprep.subr.mxu0 0.0
    %116 = vmatpush2.msra.mxu0 0.0
    %117 = vmatprep.subr.mxu0 0.0
    %118 = vmatpush2.msra.mxu0 0.0
    %119 = vmatprep.subr.mxu0 0.0
    %120 = vmatpush2.msra.mxu0 0.0
    %121 = vmatprep.subr.mxu0 0.0
    %122 = vmatpush2.msra.mxu0 0.0
    %123 = vmatprep.subr.mxu0 0.0
    %124 = vmatpush2.msra.mxu0 0.0
    %125 = vmatprep.subr.mxu0 0.0
    %126 = vmatpush2.msra.mxu0 0.0
    %127 = vmatprep.subr.mxu0 0.0
    %128 = vmatpush2.msra.mxu0 0.0
    %129 = vmatprep.subr.mxu0 0.0
    %130 = vmatpush2.msra.mxu0 0.0
    %131 = vmatprep.subr.mxu0 0.0
    %132 = vmatpush2.msra.mxu0 0.0
    %133 = vmatprep.subr.mxu0 0.0
    %134 = vmatpush2.msra.mxu0 0.0
    %135 = vmatprep.subr.mxu0 0.0
    %136 = vmatpush2.msra.mxu0 0.0
    %137 = vmatprep.subr.mxu0 0.0
    %138 = vmatpush2.msra.mxu0 0.0
    %139 = vmatprep.mubr.f32.mxu0 0.0
    %140 = vmatmul.mubr.f32.gmra.mxu0 %v64
    %v141 = vpop.f32.mrf.mxu0
    %v142 = vadd.f32 %v60, %v141
    %v143 = vpop.f32.mrf.mxu0
    %144 = vmatprep.mubr.f32.mxu0 0.0
    %145 = vmatmul.mubr.f32.gmra.mxu0 %v67
    %v146 = vpop.f32.mrf.mxu0
    %v147 = vadd.f32 %v60, %v146
    %v148 = vpop.f32.mrf.mxu0
    %149 = vmatprep.mubr.f32.mxu0 0.0
    %150 = vmatmul.mubr.f32.gmra.mxu0 %v70
    %v151 = vpop.f32.mrf.mxu0
    %v152 = vadd.f32 %v60, %v151
    %v153 = vpop.f32.mrf.mxu0
    %154 = vmatprep.mubr.f32.mxu0 0.0
    %155 = vmatmul.mubr.f32.gmra.mxu0 %v73
    %v156 = vpop.f32.mrf.mxu0
    %v157 = vadd.f32 %v60, %v156
    %v158 = vpop.f32.mrf.mxu0
    %159 = vdwg.mxu0
    %160 = vst [vmem:[#allocation7] sm:$0xff] %v142
    %161 = vst [vmem:[#allocation7 + $0x8] sm:$0xff] %v147
    %162 = vst [vmem:[#allocation7 + $0x10] sm:$0xff] %v152
    %163 = vst [vmem:[#allocation7 + $0x18] sm:$0xff] %v157
    // Predicated region
    $region22: #{tpu_custom_call.1} parent=1 // pred_check
      _
    $region23: #{tpu_custom_call.1} parent=1 // pred_check_branch
      %165 = sbr.rel (0) target = $region25
    $region24: #{tpu_custom_call.1} parent=1 // pred_region
      %s167 = ssub.s32 512, 512
      %168 = vsyncadd [#allocation4], %s167
      %s169 = sshll.u32 [#allocation7], 4
      %s170 = int_to_ptr.vmem [resolvable:$true] %s169
      %175 = dma.vmem_to_hbm [thread:$0]  %s170, 512, %s3, [#allocation4], 128, 128, 8
    $region25: #{tpu_custom_call.1} parent=1 // pred_fallthru
      _
    // Predicated region
    $region26: #{tpu_custom_call.1} parent=1 // pred_check
      _
    $region27: #{tpu_custom_call.1} parent=1 // pred_check_branch
      %177 = sbr.rel (0) target = $region29
    $region28: #{tpu_custom_call.1} parent=1 // pred_region
      %178 = dma.done [#allocation4], 512
    $region29: #{tpu_custom_call.1} parent=1 // pred_fallthru
      _
    %179 = vsyncpa [#allocation3], 1
    %180 = vsyncpa [#allocation6], 1
    %181 = vsyncpa [#allocation4], 1

</llo_original>
